<compile_context>
chip_gen: v6e
topology: v6e:2x2x1
jax: 0.10.0
libtpu: 0.0.40
codegen_flags: <defaults>
</compile_context>

<pallas_src>
import functools

import jax
import jax.numpy as jnp
from jax.experimental import pallas as pl
from jax.experimental.pallas import tpu as pltpu

_LANES = 1024                   # lane-dense last dim (multiple of 128)
_SMALL_N = 16 * 1024            # below this, skip the kernel launch entirely
_DEFAULT_TILE_BYTES = 4 << 20   # per pipeline buffer (safe on v7x's 64 MiB VMEM)
_DEFAULT_VMEM_LIMIT = 32 << 20


def _round_up(x: int, m: int) -> int:
    return ((x + m - 1) // m) * m


def _tpu_config():
    """(num_tensorcores, per_buffer_bytes, vmem_limit_bytes), safe fallbacks."""
    cores, tile_bytes, vmem_limit = 1, _DEFAULT_TILE_BYTES, _DEFAULT_VMEM_LIMIT
    try:
        info = pltpu.get_tpu_info()
        vmem_cap = getattr(info, "vmem_capacity_bytes", None)
        if isinstance(vmem_cap, int) and vmem_cap >= (100 << 20):
            # 128 MiB physical VMEM (v5e/v6e): bigger streaming tiles are free.
            tile_bytes, vmem_limit = 8 << 20, 64 << 20
        for attr in ("num_cores", "core_count", "num_tensorcores",
                     "tensorcores_per_chip"):
            v = getattr(info, attr, None)
            if isinstance(v, int) and v > 0:
                cores = min(int(v), 2)   # per-chip TensorCores (v7x megacore)
                break
    except Exception:
        pass
    return cores, tile_bytes, vmem_limit


def _mse_partial_kernel(pred_ref, tgt_ref, out_ref, acc_ref, *,
                        tile_rows, slab_rows, lanes, rows_valid, needs_mask):
    """Per-core partial sum of (pred - target)^2 over row-blocks."""
    c = pl.program_id(0)
    j = pl.program_id(1)
    nblk = pl.num_programs(1)

    @pl.when(j == 0)
    def _():
        acc_ref[...] = jnp.zeros_like(acc_ref)

    n_slabs = tile_rows // slab_rows

    def accumulate(masked, start_row):
        # Stream the tile in slab_rows x lanes sublane slabs: only ~a few vregs
        # of intermediate live at a time (no full-tile f32 temp in VMEM), pure
        # VPU work that co-issues under the HBM DMA.
        @pl.loop(0, n_slabs)
        def _(g):
            r = pl.multiple_of(g * slab_rows, slab_rows)
            p = pred_ref[pl.ds(r, slab_rows), :].astype(jnp.float32)
            t = tgt_ref[pl.ds(r, slab_rows), :].astype(jnp.float32)
            d = p - t
            d2 = d * d
            if masked:
                sub = jax.lax.broadcasted_iota(jnp.int32, (slab_rows, lanes), 0)
                d2 = jnp.where(start_row + r + sub < rows_valid, d2, 0.0)
            acc_ref[...] += d2

    if not needs_mask:
        accumulate(False, 0)
    else:
        # The last (auto-padded) block contains unspecified data beyond the
        # true row count; blocks clamped in the index_map start past the valid
        # range and get fully masked.  Full blocks take the clean path.
        start_row = (c * nblk + j) * tile_rows
        is_full = start_row + tile_rows <= rows_valid

        @pl.when(is_full)
        def _():
            accumulate(False, start_row)

        @pl.when(jnp.logical_not(is_full))
        def _():
            accumulate(True, start_row)

    @pl.when(j == nblk - 1)
    def _():
        # One XLU reduce + one SMEM scalar write per core, at the very end.
        out_ref[0, 0] = jnp.sum(acc_ref[...])


def mse_loss_pallas(prediction: jax.Array, target: jax.Array,
                    *, tile_bytes: int | None = None) -> jax.Array:
    """MSELoss (reduction='mean') computed in a Pallas TPU kernel."""
    assert prediction.shape == target.shape, "MSELoss requires matching shapes"

    n = int(prediction.size)
    if n <= _SMALL_N:
        # Tiny-input fast path: kernel launch + layout plumbing would dominate.
        d = prediction.astype(jnp.float32) - target.astype(jnp.float32)
        return jnp.mean(d * d)

    num_cores, auto_tile_bytes, vmem_limit = _tpu_config()
    tile_bytes_target = tile_bytes if tile_bytes is not None else auto_tile_bytes

    itemsize = max(1, jnp.dtype(prediction.dtype).itemsize)
    # Native sublane-slab height per dtype (f32: 8, bf16: 16, int8/fp8: 32).
    slab_rows = {4: 8, 2: 16, 1: 32}.get(itemsize, 8)
    rows = pl.cdiv(n, _LANES)

    # Dtype-aware tile: hold per-buffer bytes (not row count) ~constant.
    max_tile_rows = max(
        slab_rows,
        (tile_bytes_target // (_LANES * itemsize)) // slab_rows * slab_rows)
    tile_rows = min(max_tile_rows, _round_up(pl.cdiv(rows, num_cores), slab_rows))
    blocks_per_core = pl.cdiv(pl.cdiv(rows, num_cores), tile_rows)
    coverage_rows = num_cores * blocks_per_core * tile_rows
    needs_mask = coverage_rows != rows
    max_blk = pl.cdiv(rows, tile_rows) - 1    # last block index that exists

    # Lane-dense 2-D view.  When n is a multiple of 1024 (common ML case) this
    # is a pure reshape: no jnp.pad, no extra HBM read+write of the inputs.
    if n % _LANES == 0:
        pred2d = prediction.reshape(rows, _LANES)
        tgt2d = target.reshape(rows, _LANES)
    else:
        # TODO(synk): the sub-row tail (n % 1024 != 0) still pays one pad copy;
        # padded zeros contribute nothing to the sum so no extra masking needed.
        pad = rows * _LANES - n
        pred2d = jnp.pad(prediction.reshape(-1), (0, pad)).reshape(rows, _LANES)
        tgt2d = jnp.pad(target.reshape(-1), (0, pad)).reshape(rows, _LANES)

    cost = pl.CostEstimate(
        flops=3 * rows * _LANES,  # sub + mul + add per element
        transcendentals=0,
        bytes_accessed=2 * rows * _LANES * itemsize + num_cores * 4,
    )

    kernel = functools.partial(
        _mse_partial_kernel,
        tile_rows=tile_rows, slab_rows=slab_rows, lanes=_LANES,
        rows_valid=rows, needs_mask=needs_mask)

    # Clamp block indices that point past the array: Pallas still DMAs valid
    # memory and the in-kernel row mask zeroes their contribution.
    def in_map(c, j):
        return (jnp.minimum(c * blocks_per_core + j, max_blk), 0)

    # TODO(synk): on v7x, verify the leading "parallel" axis actually shards
    # across both TensorCores (else switch to pltpu.CORE_PARALLEL / core_map).
    partials = pl.pallas_call(
        kernel,
        out_shape=jax.ShapeDtypeStruct((num_cores, 1), jnp.float32),
        grid_spec=pltpu.PrefetchScalarGridSpec(
            num_scalar_prefetch=0,
            grid=(num_cores, blocks_per_core),
            in_specs=[
                pl.BlockSpec((tile_rows, _LANES), in_map),
                pl.BlockSpec((tile_rows, _LANES), in_map),
            ],
            out_specs=pl.BlockSpec(
                (1, 1), lambda c, j: (c, 0),
                memory_space=pltpu.MemorySpace.SMEM,
            ),
            scratch_shapes=[pltpu.VMEM((slab_rows, _LANES), jnp.float32)],
        ),
        compiler_params=pltpu.CompilerParams(
            dimension_semantics=("parallel", "arbitrary"),
            vmem_limit_bytes=vmem_limit,
        ),
        cost_estimate=cost,
    )(pred2d, tgt2d)

    # Add per-core partials and normalize by the TRUE element count.
    return jnp.sum(partials) / jnp.float32(n)


class VanillaLossPallas:
    """JAX/Pallas port of gravitorch VanillaLoss with an MSELoss criterion."""

    # TODO(synk): only the default MSELoss(reduction="mean") criterion has a
    # Pallas kernel here; arbitrary `criterion` modules / config instantiation
    # are not translated.

    def __init__(self, criterion=None, prediction_key: str = "prediction",
                 target_key: str = "target"):
        del criterion
        self._prediction_key = prediction_key
        self._target_key = target_key

    def __call__(self, net_out: dict, batch: dict) -> dict:
        prediction = net_out[self._prediction_key]
        target = batch[self._target_key]
        return {"loss": mse_loss_pallas(prediction, target)}


if __name__ == "__main__":
    key = jax.random.PRNGKey(0)
    ks = jax.random.split(key, 12)
    criterion = VanillaLossPallas()

    def ref_mse(p, t):
        return jnp.mean((p.astype(jnp.float32) - t.astype(jnp.float32)) ** 2)

    # Case 1: docstring example shape (torch.rand(2, 4)) -> tiny-input fast path.
    pred = jax.random.uniform(ks[0], (2, 4), dtype=jnp.float32)
    tgt = jax.random.uniform(ks[1], (2, 4), dtype=jnp.float32)
    loss = jax.block_until_ready(
        criterion(net_out={"prediction": pred}, batch={"target": tgt})["loss"])
    assert jnp.allclose(loss, ref_mse(pred, tgt), atol=1e-6, rtol=1e-6)

    # Case 2: non-1024-multiple element count -> kernel path, sub-row tail pad
    # plus in-kernel row masking of the partial last block.
    pred = jax.random.normal(ks[2], (33, 517), dtype=jnp.float32)
    tgt = jax.random.normal(ks[3], (33, 517), dtype=jnp.float32)
    loss = jax.block_until_ready(
        criterion(net_out={"prediction": pred}, batch={"target": tgt})["loss"])
    assert jnp.allclose(loss, ref_mse(pred, tgt), atol=1e-4, rtol=1e-4)

    # Case 3: 1024-aligned f32 -> kernel path with NO wrapper-side pad/copy.
    pred = jax.random.normal(ks[4], (48, 1024), dtype=jnp.float32)
    tgt = jax.random.normal(ks[5], (48, 1024), dtype=jnp.float32)
    loss = jax.block_until_ready(
        criterion(net_out={"prediction": pred}, batch={"target": tgt})["loss"])
    assert jnp.allclose(loss, ref_mse(pred, tgt), atol=1e-4, rtol=1e-4)

    # Case 4: bf16 streams as bf16 (half the HBM bytes), cast in-kernel;
    # 60 rows -> masked tail rows of the last block.
    pred = jax.random.normal(ks[6], (40, 1536), dtype=jnp.bfloat16)
    tgt = jax.random.normal(ks[7], (40, 1536), dtype=jnp.bfloat16)
    loss = jax.block_until_ready(
        criterion(net_out={"prediction": pred}, batch={"target": tgt})["loss"])
    assert jnp.allclose(loss, ref_mse(pred, tgt), atol=1e-3, rtol=1e-3)

    # Case 5: force a tiny tile (32 KiB/buffer) to exercise multi-block
    # accumulation across the "arbitrary" grid axis (exact coverage, no mask).
    pred = jax.random.normal(ks[8], (96, 1024), dtype=jnp.float32)
    tgt = jax.random.normal(ks[9], (96, 1024), dtype=jnp.float32)
    loss = jax.block_until_ready(mse_loss_pallas(pred, tgt, tile_bytes=32 * 1024))
    assert jnp.allclose(loss, ref_mse(pred, tgt), atol=1e-4, rtol=1e-4)

    # Case 6: tiny tile + non-dividing row count -> multi-block AND masked
    # partial last block together.
    pred = jax.random.normal(ks[10], (50, 1024), dtype=jnp.float32)
    tgt = jax.random.normal(ks[11], (50, 1024), dtype=jnp.float32)
    loss = jax.block_until_ready(mse_loss_pallas(pred, tgt, tile_bytes=32 * 1024))
    assert jnp.allclose(loss, ref_mse(pred, tgt), atol=1e-4, rtol=1e-4)

    print("KERNEL_OK")
</pallas_src>

<mosaic_0001>
module attributes {stable_mosaic.version = 11 : i64} {
  func.func @_mse_partial_kernel(%arg0: i32, %arg1: i32, %arg2: memref<24x1024xf32, #tpu.memory_space<vmem>>, %arg3: memref<24x1024xf32, #tpu.memory_space<vmem>>, %arg4: memref<1x1xf32, #tpu.memory_space<smem>>, %arg5: memref<8x1024xf32, #tpu.memory_space<vmem>>) attributes {dimension_semantics = [#tpu.dimension_semantics<parallel>, #tpu.dimension_semantics<arbitrary>], iteration_bounds = array<i64: 1, 1>, scalar_prefetch = 0 : i64, scratch_operands = 1 : i64, tpu.core_type = #tpu.core_type<tc>, window_params = [{transform_indices = @transform_0, window_bounds = array<i64: 24, 1024>}, {transform_indices = @transform_1, window_bounds = array<i64: 24, 1024>}, {transform_indices = @transform_2, window_bounds = array<i64: 1, 1>}]} {
    %c0_i32 = arith.constant 0 : i32
    %0 = arith.cmpi eq, %arg1, %c0_i32 : i32
    %1 = arith.extui %0 : i1 to i32
    %c0_i32_0 = arith.constant 0 : i32
    %2 = arith.cmpi ne, %1, %c0_i32_0 : i32
    scf.if %2 {
      %cst = arith.constant 0.000000e+00 : f32
      %16 = vector.broadcast %cst : f32 to vector<8x1024xf32>
      %c0 = arith.constant 0 : index
      %c0_6 = arith.constant 0 : index
      %17 = vector.load %arg5[%c0, %c0_6] : memref<8x1024xf32, #tpu.memory_space<vmem>>, vector<8x1024xf32>
      tpu.vector_store %arg5[%c0, %c0_6], %16 {strides = array<i32>} : memref<8x1024xf32, #tpu.memory_space<vmem>>, vector<8x1024xf32>,
    } else {
    }
    %c1_i32 = arith.constant 1 : i32
    %3 = arith.muli %arg0, %c1_i32 : i32
    %4 = arith.addi %3, %arg1 : i32
    %c24_i32 = arith.constant 24 : i32
    %5 = arith.muli %4, %c24_i32 : i32
    %c24_i32_1 = arith.constant 24 : i32
    %6 = arith.addi %5, %c24_i32_1 : i32
    %c17_i32 = arith.constant 17 : i32
    %7 = arith.cmpi sle, %6, %c17_i32 : i32
    %8 = arith.extui %7 : i1 to i32
    %c0_i32_2 = arith.constant 0 : i32
    %9 = arith.cmpi ne, %8, %c0_i32_2 : i32
    scf.if %9 {
      %c0_i32_6 = arith.constant 0 : i32
      %c3_i32 = arith.constant 3 : i32
      %16 = arith.addi %c0_i32_6, %c3_i32 : i32
      %c1_i32_7 = arith.constant 1 : i32
      scf.for %arg6 = %c0_i32_6 to %16 step %c1_i32_7  : i32 {
        %c1_i32_9 = arith.constant 1 : i32
        %17 = arith.muli %arg6, %c1_i32_9 : i32
        %c0_i32_10 = arith.constant 0 : i32
        %18 = arith.addi %c0_i32_10, %17 : i32
        %c8_i32 = arith.constant 8 : i32
        %19 = arith.muli %18, %c8_i32 : i32
        %20 = tpu.assume_multiple %19, 8 : i32
        %21 = arith.index_cast %20 : i32 to index
        %c0 = arith.constant 0 : index
        %22 = vector.load %arg2[%21, %c0] : memref<24x1024xf32, #tpu.memory_space<vmem>>, vector<8x1024xf32>
        %23 = arith.index_cast %20 : i32 to index
        %c0_11 = arith.constant 0 : index
        %24 = vector.load %arg3[%23, %c0_11] : memref<24x1024xf32, #tpu.memory_space<vmem>>, vector<8x1024xf32>
        %25 = arith.subf %22, %24 : vector<8x1024xf32>
        %26 = arith.mulf %25, %25 : vector<8x1024xf32>
        %c0_12 = arith.constant 0 : index
        %c0_13 = arith.constant 0 : index
        %27 = vector.load %arg5[%c0_12, %c0_13] : memref<8x1024xf32, #tpu.memory_space<vmem>>, vector<8x1024xf32>
        %28 = arith.addf %27, %26 : vector<8x1024xf32>
        %c0_14 = arith.constant 0 : index
        %c0_15 = arith.constant 0 : index
        %29 = vector.load %arg5[%c0_14, %c0_15] : memref<8x1024xf32, #tpu.memory_space<vmem>>, vector<8x1024xf32>
        tpu.vector_store %arg5[%c0_14, %c0_15], %28 {strides = array<i32>} : memref<8x1024xf32, #tpu.memory_space<vmem>>, vector<8x1024xf32>,
      }
      %c3_i32_8 = arith.constant 3 : i32
    } else {
    }
    %true = arith.constant true
    %10 = arith.xori %7, %true : i1
    %11 = arith.extui %10 : i1 to i32
    %c0_i32_3 = arith.constant 0 : i32
    %12 = arith.cmpi ne, %11, %c0_i32_3 : i32
    scf.if %12 {
      %c0_i32_6 = arith.constant 0 : i32
      %c3_i32 = arith.constant 3 : i32
      %16 = arith.addi %c0_i32_6, %c3_i32 : i32
      %c1_i32_7 = arith.constant 1 : i32
      scf.for %arg6 = %c0_i32_6 to %16 step %c1_i32_7  : i32 {
        %c1_i32_9 = arith.constant 1 : i32
        %17 = arith.muli %arg6, %c1_i32_9 : i32
        %c0_i32_10 = arith.constant 0 : i32
        %18 = arith.addi %c0_i32_10, %17 : i32
        %c8_i32 = arith.constant 8 : i32
        %19 = arith.muli %18, %c8_i32 : i32
        %20 = tpu.assume_multiple %19, 8 : i32
        %21 = arith.index_cast %20 : i32 to index
        %c0 = arith.constant 0 : index
        %22 = vector.load %arg2[%21, %c0] : memref<24x1024xf32, #tpu.memory_space<vmem>>, vector<8x1024xf32>
        %23 = arith.index_cast %20 : i32 to index
        %c0_11 = arith.constant 0 : index
        %24 = vector.load %arg3[%23, %c0_11] : memref<24x1024xf32, #tpu.memory_space<vmem>>, vector<8x1024xf32>
        %25 = arith.subf %22, %24 : vector<8x1024xf32>
        %26 = arith.mulf %25, %25 : vector<8x1024xf32>
        %27 = tpu.iota {dimensions = array<i32: 0>} : vector<8x1024xi32>
        %28 = arith.addi %5, %20 : i32
        %29 = vector.broadcast %28 : i32 to vector<8x1024xi32>
        %30 = arith.addi %29, %27 : vector<8x1024xi32>
        %c17_i32_12 = arith.constant 17 : i32
        %31 = vector.broadcast %c17_i32_12 : i32 to vector<8x1024xi32>
        %32 = arith.cmpi slt, %30, %31 : vector<8x1024xi32>
        %cst = arith.constant 0.000000e+00 : f32
        %33 = vector.broadcast %cst : f32 to vector<8x1024xf32>
        %34 = arith.select %32, %26, %33 : vector<8x1024xi1>, vector<8x1024xf32>
        %c0_13 = arith.constant 0 : index
        %c0_14 = arith.constant 0 : index
        %35 = vector.load %arg5[%c0_13, %c0_14] : memref<8x1024xf32, #tpu.memory_space<vmem>>, vector<8x1024xf32>
        %36 = arith.addf %35, %34 : vector<8x1024xf32>
        %c0_15 = arith.constant 0 : index
        %c0_16 = arith.constant 0 : index
        %37 = vector.load %arg5[%c0_15, %c0_16] : memref<8x1024xf32, #tpu.memory_space<vmem>>, vector<8x1024xf32>
        tpu.vector_store %arg5[%c0_15, %c0_16], %36 {strides = array<i32>} : memref<8x1024xf32, #tpu.memory_space<vmem>>, vector<8x1024xf32>,
      }
      %c3_i32_8 = arith.constant 3 : i32
    } else {
    }
    %c0_i32_4 = arith.constant 0 : i32
    %13 = arith.cmpi eq, %arg1, %c0_i32_4 : i32
    %14 = arith.extui %13 : i1 to i32
    %c0_i32_5 = arith.constant 0 : i32
    %15 = arith.cmpi ne, %14, %c0_i32_5 : i32
    scf.if %15 {
      %c0 = arith.constant 0 : index
      %c0_6 = arith.constant 0 : index
      %16 = vector.load %arg5[%c0, %c0_6] : memref<8x1024xf32, #tpu.memory_space<vmem>>, vector<8x1024xf32>
      %17 = vector.shape_cast %16 : vector<8x1024xf32> to vector<1x8x1024xf32>
      %cst = arith.constant dense<0.000000e+00> : vector<1xf32>
      %18 = vector.multi_reduction <add>, %17, %cst [1, 2] : vector<1x8x1024xf32> to vector<1xf32>
      %19 = vector.shape_cast %18 : vector<1xf32> to vector<1x1x1xf32>
      %20 = vector.extract %19[0, 0, 0] : f32 from vector<1x1x1xf32>
      %c0_7 = arith.constant 0 : index
      %c0_8 = arith.constant 0 : index
      %21 = memref.load %arg4[%c0_7, %c0_8] : memref<1x1xf32, #tpu.memory_space<smem>>
      memref.store %20, %arg4[%c0_7, %c0_8] : memref<1x1xf32, #tpu.memory_space<smem>>
    } else {
    }
    return
  }
  func.func @transform_0(%arg0: i32, %arg1: i32) -> (i32, i32) {
    %c1_i32 = arith.constant 1 : i32
    %0 = arith.muli %arg0, %c1_i32 : i32
    %1 = arith.addi %0, %arg1 : i32
    %c0_i32 = arith.constant 0 : i32
    %2 = arith.minsi %1, %c0_i32 : i32
    %c0_i32_0 = arith.constant 0 : i32
    %c0_i32_1 = arith.constant 0 : i32
    return %2, %c0_i32_0 : i32, i32
  }
  func.func @transform_1(%arg0: i32, %arg1: i32) -> (i32, i32) {
    %c1_i32 = arith.constant 1 : i32
    %0 = arith.muli %arg0, %c1_i32 : i32
    %1 = arith.addi %0, %arg1 : i32
    %c0_i32 = arith.constant 0 : i32
    %2 = arith.minsi %1, %c0_i32 : i32
    %c0_i32_0 = arith.constant 0 : i32
    %c0_i32_1 = arith.constant 0 : i32
    return %2, %c0_i32_0 : i32, i32
  }
  func.func @transform_2(%arg0: i32, %arg1: i32) -> (i32, i32) {
    %c0_i32 = arith.constant 0 : i32
    %c0_i32_0 = arith.constant 0 : i32
    return %arg0, %c0_i32 : i32, i32
  }
}

</mosaic_0001>

<llo_original>
// kernel: tpu_custom_call.1
$region0: #{tpu_custom_call.1}
  #allocation0 [shape = 'u32[]', space=smem, size = 0x4, offset = 0x4, fixed_abs, tag = 'smem constant byte address 0x4 - core index']
  #allocation1 [shape = 'u32[144,128]{1,0:T(1,128)}', space=vmem, size = 0x12000, scoped, tag = 'internal scratch']
  #allocation2 [shape = 'f32[8,1024]{1,0:T(8,128)}', space=vmem, size = 0x8000, scoped, tag = 'scratch operand']
  %s0 = inlined_call_operand.hbm [shape: f32[17,1024], index: 0, kind: input, shape index: {}]
  %s1 = inlined_call_operand.hbm [shape: f32[17,1024], index: 1, kind: input, shape index: {}]
  %s2 = inlined_call_operand.hbm [shape: f32[1,1], index: 2, kind: output, shape index: {}]
  %s3 = sld [smem:[#allocation0]]
  $region56: #{tpu_custom_call.1} parent=0
    _
  %s5 = ssub.s32 1, %s3
  %s6 = scalar_select 0, %s5, %s3
  $region1: #{tpu_custom_call.1} parent=0
    #allocation3 [shape = 'u8[98304]{0}', space=vmem, size = 0x18000, scoped, tag = 'input window, operand 0, single buffered']
    #allocation4 [shape = 's32[1]{0}', space=sflag, size = 0x4, scoped, tag = 'scoped memory for tpu_custom_call.1']
    #allocation5 [shape = 's32[1]{0}', space=sflag, size = 0x4, scoped, tag = 'scoped memory for tpu_custom_call.1']
    #allocation6 [shape = 'u8[98304]{0}', space=vmem, size = 0x18000, scoped, tag = 'input window, operand 1, single buffered']
    #allocation7 [shape = 's32[1]{0}', space=sflag, size = 0x4, scoped, tag = 'scoped memory for tpu_custom_call.1']
    #allocation8 [shape = 'u8[512]{0}', space=smem, size = 0x200, scoped, tag = 'output window, operand 0, single buffered']
    %7 = vsyncpa [#allocation4], 0
    %8 = vsyncpa [#allocation7], 0
    %9 = vsyncpa [#allocation5], 0
    // Predicated region
    $region2: #{tpu_custom_call.1} parent=1 // pred_check
      _
    $region3: #{tpu_custom_call.1} parent=1 // pred_check_branch
      %11 = sbr.rel (0) target = $region5
    $region4: #{tpu_custom_call.1} parent=1 // pred_region
      %s12 = sadd.s32 0, 0
      %p13 = scmp.lt.s32.totalorder %s12, 0
      %s14 = scalar_select %p13, %s12, 0
      %s15 = smul.u32 3, %s14
      %s17 = ssub.s32 3072, 3072
      %18 = vsyncadd [#allocation4], %s17
      %s19 = smul.addr %s15, 8
      %s20 = smul.addr %s19, 128
      %s21 = scalar_lea.hbm %s0, %s20
      %s22 = sshll.u32 [#allocation3], 4
      %s23 = int_to_ptr.vmem [resolvable:$true] %s22
      %28 = dma.hbm_to_vmem [thread:$0]  %s21, 3072, %s23, [#allocation4], 1024, 1024, 64
    $region5: #{tpu_custom_call.1} parent=1 // pred_fallthru
      _
    // Predicated region
    $region6: #{tpu_custom_call.1} parent=1 // pred_check
      _
    $region7: #{tpu_custom_call.1} parent=1 // pred_check_branch
      %30 = sbr.rel (0) target = $region9
    $region8: #{tpu_custom_call.1} parent=1 // pred_region
      %s31 = sadd.s32 0, 0
      %p32 = scmp.lt.s32.totalorder %s31, 0
      %s33 = scalar_select %p32, %s31, 0
      %s34 = smul.u32 3, %s33
      %s36 = ssub.s32 3072, 3072
      %37 = vsyncadd [#allocation7], %s36
      %s38 = smul.addr %s34, 8
      %s39 = smul.addr %s38, 128
      %s40 = scalar_lea.hbm %s1, %s39
      %s41 = sshll.u32 [#allocation6], 4
      %s42 = int_to_ptr.vmem [resolvable:$true] %s41
      %47 = dma.hbm_to_vmem [thread:$0]  %s40, 3072, %s42, [#allocation7], 1024, 1024, 64
    $region9: #{tpu_custom_call.1} parent=1 // pred_fallthru
      _
    // Predicated region
    $region10: #{tpu_custom_call.1} parent=1 // pred_check
      _
    $region11: #{tpu_custom_call.1} parent=1 // pred_check_branch
      %49 = sbr.rel (0) target = $region13
    $region12: #{tpu_custom_call.1} parent=1 // pred_region
      %50 = dma.done [#allocation4], 3072
    $region13: #{tpu_custom_call.1} parent=1 // pred_fallthru
      _
    // Predicated region
    $region14: #{tpu_custom_call.1} parent=1 // pred_check
      _
    $region15: #{tpu_custom_call.1} parent=1 // pred_check_branch
      %52 = sbr.rel (0) target = $region17
    $region16: #{tpu_custom_call.1} parent=1 // pred_region
      %53 = dma.done [#allocation7], 3072
    $region17: #{tpu_custom_call.1} parent=1 // pred_fallthru
      _
    %s54 = sadd.s32 0, 0
    %p55 = scmp.lt.s32.totalorder %s54, 0
    %s56 = scalar_select %p55, %s54, 0
    %s57 = smul.u32 3, %s56
    %s58 = sadd.s32 0, 0
    %p59 = scmp.lt.s32.totalorder %s58, 0
    %s60 = scalar_select %p59, %s58, 0
    %s61 = smul.u32 3, %s60
    %p62 = scmp.eq.s32.totalorder 0, 0
    // Predicated region
    $region18: #{tpu_custom_call.1} parent=1 // pred_check
      %p63 = pneg %p62
    $region19: #{tpu_custom_call.1} parent=1 // pred_check_branch
      %65 = sbr.rel (%p63) target = $region21
    $region20: #{tpu_custom_call.1} parent=1 // pred_region
      %66 = vst [vmem:[#allocation2] sm:$0xff] 0.0
      %67 = vst [vmem:[#allocation2 + $0x8] sm:$0xff] 0.0
      %68 = vst [vmem:[#allocation2 + $0x10] sm:$0xff] 0.0
      %69 = vst [vmem:[#allocation2 + $0x18] sm:$0xff] 0.0
      %70 = vst [vmem:[#allocation2 + $0x20] sm:$0xff] 0.0
      %71 = vst [vmem:[#allocation2 + $0x28] sm:$0xff] 0.0
      %72 = vst [vmem:[#allocation2 + $0x30] sm:$0xff] 0.0
      %73 = vst [vmem:[#allocation2 + $0x38] sm:$0xff] 0.0
    $region21: #{tpu_custom_call.1} parent=1 // pred_fallthru
      _
    %s74 = sadd.s32 0, 0
    %s75 = smul.u32 %s74, 24
    %s76 = sadd.s32 %s75, 24
    %p77 = scmp.le.s32.totalorder %s76, 17
    // Predicated region
    $region22: #{tpu_custom_call.1} parent=1 // pred_check
      %p78 = pneg %p77
    $region23: #{tpu_custom_call.1} parent=1 // pred_check_branch
      %80 = sbr.rel (%p78) target = $region25
    $region24: #{tpu_custom_call.1} parent=1 // pred_region
      loop: start=0, step=1, limit=3
      $region26: #{tpu_custom_call.1} parent=24 // loop_pre_header
        _
      $region27: #{tpu_custom_call.1} parent=24 // loop_header
        %s82 = sphi 0, %s86
        %p83 = scmp.ge.s32.totalorder %s82, 3
      $region28: #{tpu_custom_call.1} parent=24 // loop_header_branch
        %85 = sbr.rel (%p83) target = $region32
      $region29: #{tpu_custom_call.1} parent=24 // loop_body
        %s87 = smul.u32 %s82, 8
        %s88 = sshra.s32 %s87, 3
        %s89 = sand.u32 %s87, 7
        %s90 = smul.u32 %s88, 8
        %s91 = smul.addr %s90, 8
        %s92 = scalar_lea.vmem [#allocation3], %s91
        %v93 = vld [vmem:[%s92] sm:$0xff]
        %v94 = vld [vmem:[%s92 + $0x8] sm:$0xff]
        %v95 = vld [vmem:[%s92 + $0x10] sm:$0xff]
        %v96 = vld [vmem:[%s92 + $0x18] sm:$0xff]
        %v97 = vld [vmem:[%s92 + $0x20] sm:$0xff]
        %v98 = vld [vmem:[%s92 + $0x28] sm:$0xff]
        %v99 = vld [vmem:[%s92 + $0x30] sm:$0xff]
        %v100 = vld [vmem:[%s92 + $0x38] sm:$0xff]
        %s101 = smul.addr %s90, 8
        %s102 = scalar_lea.vmem [#allocation6], %s101
        %v103 = vld [vmem:[%s102] sm:$0xff]
        %v104 = vld [vmem:[%s102 + $0x8] sm:$0xff]
        %v105 = vld [vmem:[%s102 + $0x10] sm:$0xff]
        %v106 = vld [vmem:[%s102 + $0x18] sm:$0xff]
        %v107 = vld [vmem:[%s102 + $0x20] sm:$0xff]
        %v108 = vld [vmem:[%s102 + $0x28] sm:$0xff]
        %v109 = vld [vmem:[%s102 + $0x30] sm:$0xff]
        %v110 = vld [vmem:[%s102 + $0x38] sm:$0xff]
        %v111 = vsub.f32 %v93, %v103
        %v112 = vsub.f32 %v94, %v104
        %v113 = vsub.f32 %v95, %v105
        %v114 = vsub.f32 %v96, %v106
        %v115 = vsub.f32 %v97, %v107
        %v116 = vsub.f32 %v98, %v108
        %v117 = vsub.f32 %v99, %v109
        %v118 = vsub.f32 %v100, %v110
        %v119 = vmul.f32 %v111, %v111
        %v120 = vmul.f32 %v112, %v112
        %v121 = vmul.f32 %v113, %v113
        %v122 = vmul.f32 %v114, %v114
        %v123 = vmul.f32 %v115, %v115
        %v124 = vmul.f32 %v116, %v116
        %v125 = vmul.f32 %v117, %v117
        %v126 = vmul.f32 %v118, %v118
        %v127 = vld [vmem:[#allocation2] sm:$0xff]
        %v128 = vld [vmem:[#allocation2 + $0x8] sm:$0xff]
        %v129 = vld [vmem:[#allocation2 + $0x10] sm:$0xff]
        %v130 = vld [vmem:[#allocation2 + $0x18] sm:$0xff]
        %v131 = vld [vmem:[#allocation2 + $0x20] sm:$0xff]
        %v132 = vld [vmem:[#allocation2 + $0x28] sm:$0xff]
        %v133 = vld [vmem:[#allocation2 + $0x30] sm:$0xff]
        %v134 = vld [vmem:[#allocation2 + $0x38] sm:$0xff]
        %v135 = vadd.f32 %v127, %v119
        %v136 = vadd.f32 %v128, %v120
        %v137 = vadd.f32 %v129, %v121
        %v138 = vadd.f32 %v130, %v122
        %v139 = vadd.f32 %v131, %v123
        %v140 = vadd.f32 %v132, %v124
        %v141 = vadd.f32 %v133, %v125
        %v142 = vadd.f32 %v134, %v126
        %143 = vst [vmem:[#allocation2] sm:$0xff] %v135
        %144 = vst [vmem:[#allocation2 + $0x8] sm:$0xff] %v136
        %145 = vst [vmem:[#allocation2 + $0x10] sm:$0xff] %v137
        %146 = vst [vmem:[#allocation2 + $0x18] sm:$0xff] %v138
        %147 = vst [vmem:[#allocation2 + $0x20] sm:$0xff] %v139
        %148 = vst [vmem:[#allocation2 + $0x28] sm:$0xff] %v140
        %149 = vst [vmem:[#allocation2 + $0x30] sm:$0xff] %v141
        %150 = vst [vmem:[#allocation2 + $0x38] sm:$0xff] %v142
      $region30: #{tpu_custom_call.1} parent=24 // loop_footer
        %s86 = sadd.s32 1, %s82
      $region31: #{tpu_custom_call.1} parent=24 // loop_footer_branch
        %81 = sbr.rel target = $region27
      $region32: #{tpu_custom_call.1} parent=24 // loop_exit
        _
    $region25: #{tpu_custom_call.1} parent=1 // pred_fallthru
      _
    %p151 = scmp.gt.s32.totalorder %s76, 17
    // Predicated region
    $region33: #{tpu_custom_call.1} parent=1 // pred_check
      %p152 = pneg %p151
    $region34: #{tpu_custom_call.1} parent=1 // pred_check_branch
      %154 = sbr.rel (%p152) target = $region36
    $region35: #{tpu_custom_call.1} parent=1 // pred_region
      loop: start=0, step=1, limit=3
      $region37: #{tpu_custom_call.1} parent=35 // loop_pre_header
        _
      $region38: #{tpu_custom_call.1} parent=35 // loop_header
        %s156 = sphi 0, %s160
        %p157 = scmp.ge.s32.totalorder %s156, 3
      $region39: #{tpu_custom_call.1} parent=35 // loop_header_branch
        %159 = sbr.rel (%p157) target = $region43
      $region40: #{tpu_custom_call.1} parent=35 // loop_body
        %s161 = smul.u32 %s156, 8
        %s162 = sshra.s32 %s161, 3
        %s163 = sand.u32 %s161, 7
        %s164 = smul.u32 %s162, 8
        %s165 = smul.addr %s164, 8
        %s166 = scalar_lea.vmem [#allocation3], %s165
        %v167 = vld [vmem:[%s166] sm:$0xff]
        %v168 = vld [vmem:[%s166 + $0x8] sm:$0xff]
        %v169 = vld [vmem:[%s166 + $0x10] sm:$0xff]
        %v170 = vld [vmem:[%s166 + $0x18] sm:$0xff]
        %v171 = vld [vmem:[%s166 + $0x20] sm:$0xff]
        %v172 = vld [vmem:[%s166 + $0x28] sm:$0xff]
        %v173 = vld [vmem:[%s166 + $0x30] sm:$0xff]
        %v174 = vld [vmem:[%s166 + $0x38] sm:$0xff]
        %s175 = smul.addr %s164, 8
        %s176 = scalar_lea.vmem [#allocation6], %s175
        %v177 = vld [vmem:[%s176] sm:$0xff]
        %v178 = vld [vmem:[%s176 + $0x8] sm:$0xff]
        %v179 = vld [vmem:[%s176 + $0x10] sm:$0xff]
        %v180 = vld [vmem:[%s176 + $0x18] sm:$0xff]
        %v181 = vld [vmem:[%s176 + $0x20] sm:$0xff]
        %v182 = vld [vmem:[%s176 + $0x28] sm:$0xff]
        %v183 = vld [vmem:[%s176 + $0x30] sm:$0xff]
        %v184 = vld [vmem:[%s176 + $0x38] sm:$0xff]
        %v185 = vsub.f32 %v167, %v177
        %v186 = vsub.f32 %v168, %v178
        %v187 = vsub.f32 %v169, %v179
        %v188 = vsub.f32 %v170, %v180
        %v189 = vsub.f32 %v171, %v181
        %v190 = vsub.f32 %v172, %v182
        %v191 = vsub.f32 %v173, %v183
        %v192 = vsub.f32 %v174, %v184
        %v193 = vmul.f32 %v185, %v185
        %v194 = vmul.f32 %v186, %v186
        %v195 = vmul.f32 %v187, %v187
        %v196 = vmul.f32 %v188, %v188
        %v197 = vmul.f32 %v189, %v189
        %v198 = vmul.f32 %v190, %v190
        %v199 = vmul.f32 %v191, %v191
        %v200 = vmul.f32 %v192, %v192
        %v201 = vlaneseq
        %v202 = vshrl.u32 %v201, 7
        %s203 = sadd.s32 %s75, %s161
        %v204 = vstv %s203
        %v205 = vadd.s32 %v204, %v202
        %vm206 = vcmp.lt.s32.totalorder %v205, 17
        %v207 = vsel %vm206, %v193, 0.0
        %v208 = vsel %vm206, %v194, 0.0
        %v209 = vsel %vm206, %v195, 0.0
        %v210 = vsel %vm206, %v196, 0.0
        %v211 = vsel %vm206, %v197, 0.0
        %v212 = vsel %vm206, %v198, 0.0
        %v213 = vsel %vm206, %v199, 0.0
        %v214 = vsel %vm206, %v200, 0.0
        %v215 = vld [vmem:[#allocation2] sm:$0xff]
        %v216 = vld [vmem:[#allocation2 + $0x8] sm:$0xff]
        %v217 = vld [vmem:[#allocation2 + $0x10] sm:$0xff]
        %v218 = vld [vmem:[#allocation2 + $0x18] sm:$0xff]
        %v219 = vld [vmem:[#allocation2 + $0x20] sm:$0xff]
        %v220 = vld [vmem:[#allocation2 + $0x28] sm:$0xff]
        %v221 = vld [vmem:[#allocation2 + $0x30] sm:$0xff]
        %v222 = vld [vmem:[#allocation2 + $0x38] sm:$0xff]
        %v223 = vadd.f32 %v215, %v207
        %v224 = vadd.f32 %v216, %v208
        %v225 = vadd.f32 %v217, %v209
        %v226 = vadd.f32 %v218, %v210
        %v227 = vadd.f32 %v219, %v211
        %v228 = vadd.f32 %v220, %v212
        %v229 = vadd.f32 %v221, %v213
        %v230 = vadd.f32 %v222, %v214
        %231 = vst [vmem:[#allocation2] sm:$0xff] %v223
        %232 = vst [vmem:[#allocation2 + $0x8] sm:$0xff] %v224
        %233 = vst [vmem:[#allocation2 + $0x10] sm:$0xff] %v225
        %234 = vst [vmem:[#allocation2 + $0x18] sm:$0xff] %v226
        %235 = vst [vmem:[#allocation2 + $0x20] sm:$0xff] %v227
        %236 = vst [vmem:[#allocation2 + $0x28] sm:$0xff] %v228
        %237 = vst [vmem:[#allocation2 + $0x30] sm:$0xff] %v229
        %238 = vst [vmem:[#allocation2 + $0x38] sm:$0xff] %v230
      $region41: #{tpu_custom_call.1} parent=35 // loop_footer
        %s160 = sadd.s32 1, %s156
      $region42: #{tpu_custom_call.1} parent=35 // loop_footer_branch
        %155 = sbr.rel target = $region38
      $region43: #{tpu_custom_call.1} parent=35 // loop_exit
        _
    $region36: #{tpu_custom_call.1} parent=1 // pred_fallthru
      _
    // Predicated region
    $region44: #{tpu_custom_call.1} parent=1 // pred_check
      %p239 = pneg %p62
    $region45: #{tpu_custom_call.1} parent=1 // pred_check_branch
      %241 = sbr.rel (%p239) target = $region47
    $region46: #{tpu_custom_call.1} parent=1 // pred_region
      %v242 = vld [vmem:[#allocation2] sm:$0xff]
      %v243 = vld [vmem:[#allocation2 + $0x8] sm:$0xff]
      %v244 = vld [vmem:[#allocation2 + $0x10] sm:$0xff]
      %v245 = vld [vmem:[#allocation2 + $0x18] sm:$0xff]
      %v246 = vld [vmem:[#allocation2 + $0x20] sm:$0xff]
      %v247 = vld [vmem:[#allocation2 + $0x28] sm:$0xff]
      %v248 = vld [vmem:[#allocation2 + $0x30] sm:$0xff]
      %v249 = vld [vmem:[#allocation2 + $0x38] sm:$0xff]
      %v250 = vadd.f32 %v242, %v243
      %v251 = vadd.f32 %v250, %v244
      %v252 = vadd.f32 %v251, %v245
      %v253 = vadd.f32 %v252, %v246
      %v254 = vadd.f32 %v253, %v247
      %v255 = vadd.f32 %v254, %v248
      %v256 = vadd.f32 %v255, %v249
      %257 = vadd.xlane.f32.xlu0 %v256
      %v258 = vpop.xlane.xlu0 %257
      %v259 = vrot.slane %v258, 4
      %v260 = vadd.f32 %v258, %v259
      %v261 = vrot.slane %v260, 2
      %v262 = vadd.f32 %v260, %v261
      %v263 = vrot.slane %v262, 1
      %v264 = vadd.f32 %v262, %v263
      %s265 = vtos %v264
      %s266 = scalar_lea.smem [#allocation8], 0
      %267 = sst [smem:[%s266]] %s265
    $region47: #{tpu_custom_call.1} parent=1 // pred_fallthru
      _
    // Predicated region
    $region48: #{tpu_custom_call.1} parent=1 // pred_check
      _
    $region49: #{tpu_custom_call.1} parent=1 // pred_check_branch
      %269 = sbr.rel (0) target = $region51
    $region50: #{tpu_custom_call.1} parent=1 // pred_region
      %s271 = ssub.s32 16, 16
      %272 = vsyncadd [#allocation5], %s271
      %275 = dma.smem_to_hbm [#allocation8], 16, %s2, [#allocation5]
    $region51: #{tpu_custom_call.1} parent=1 // pred_fallthru
      _
    // Predicated region
    $region52: #{tpu_custom_call.1} parent=1 // pred_check
      _
    $region53: #{tpu_custom_call.1} parent=1 // pred_check_branch
      %277 = sbr.rel (0) target = $region55
    $region54: #{tpu_custom_call.1} parent=1 // pred_region
      %278 = dma.done [#allocation5], 16
    $region55: #{tpu_custom_call.1} parent=1 // pred_fallthru
      _
    %279 = sfence
    %280 = vsyncpa [#allocation4], 1
    %281 = vsyncpa [#allocation7], 1
    %282 = vsyncpa [#allocation5], 1

</llo_original>
